<compile_context>
chip_gen: v7x
topology: tpu7x:2x2x1
jax: 0.10.0
libtpu: 0.0.40
codegen_flags: <defaults>
</compile_context>

<pallas_src>
import functools

import jax
import jax.numpy as jnp
from jax.experimental import pallas as pl
from jax.experimental.pallas import tpu as pltpu


def _round_up(n, m):
    return ((n + m - 1) // m) * m


# ----------------------------- kernels --------------------------------------

def _ffn_kernel_single(x_ref, w1_ref, b1_ref, w2_ref, b2_ref, o_ref):
    """Whole d_ff handled in one step: no accumulator scratch round-trip."""
    h = jnp.dot(x_ref[...], w1_ref[...], preferred_element_type=jnp.float32)
    h = jnp.maximum(h + b1_ref[...], 0.0)                       # f32 VPU
    y = jnp.dot(h.astype(w2_ref.dtype), w2_ref[...],
                preferred_element_type=jnp.float32)
    o_ref[...] = (y + b2_ref[...]).astype(o_ref.dtype)


def _ffn_kernel_acc(x_ref, w1_ref, b1_ref, w2_ref, b2_ref, o_ref, acc_ref):
    """d_ff tiled along grid axis 1 (reduction); f32 VMEM accumulator."""
    k = pl.program_id(1)

    @pl.when(k == 0)
    def _():
        # Fold the output bias into the accumulator init (saves a finalize add).
        acc_ref[...] = jnp.broadcast_to(b2_ref[...], acc_ref.shape)

    h = jnp.dot(x_ref[...], w1_ref[...], preferred_element_type=jnp.float32)
    h = jnp.maximum(h + b1_ref[...], 0.0)                       # f32 VPU
    acc_ref[...] += jnp.dot(h.astype(w2_ref.dtype), w2_ref[...],
                            preferred_element_type=jnp.float32)

    @pl.when(k == pl.num_programs(1) - 1)
    def _():
        o_ref[...] = acc_ref[...].astype(o_ref.dtype)


# ------------------------------ wrapper --------------------------------------

def _vmem_bytes(tm, tf, d_model_p, comp_is, out_is, with_acc):
    """Rough per-step VMEM footprint (double-buffered inputs/outputs)."""
    x_b = tm * d_model_p * comp_is * 2
    w_b = 2 * (d_model_p * tf * comp_is * 2)          # W1 + W2, double-buffered
    b_b = (tf + d_model_p) * 4 * 2
    o_b = tm * d_model_p * out_is * 2
    a_b = tm * d_model_p * 4 if with_acc else 0
    return x_b + w_b + b_b + o_b + a_b


@functools.partial(jax.jit, static_argnames=("tm", "tf", "compute_dtype"))
def position_wise_ffn(x, w1, b1, w2, b2, *, tm=512, tf=None,
                      compute_dtype=jnp.bfloat16):
    """x: [B, S, d_model]; w1: [d_model, d_ff]; b1: [d_ff];
       w2: [d_ff, d_model]; b2: [d_model].  Returns [B, S, d_model] in x.dtype."""
    B, S, d_model = x.shape
    d_ff = w1.shape[1]
    out_dtype = x.dtype
    M = B * S

    comp_is = jnp.dtype(compute_dtype).itemsize
    out_is = jnp.dtype(out_dtype).itemsize

    # ---- derive lane-dense, tile-aligned padded dims ----
    d_model_p = _round_up(d_model, 128)
    tm_eff = min(tm, _round_up(M, 8))                 # multiple of 8
    M_p = _round_up(M, tm_eff)

    d_ff_128 = _round_up(d_ff, 128)
    vmem_budget = 44 * 1024 * 1024
    if tf is None:
        tf_eff = None
        for cand in sorted({d_ff_128, 4096, 2048, 1024, 512, 256, 128},
                           reverse=True):
            if cand > d_ff_128:
                continue
            need_acc = cand < d_ff_128
            if _vmem_bytes(tm_eff, cand, d_model_p, comp_is, out_is,
                           need_acc) <= vmem_budget:
                tf_eff = cand
                break
        if tf_eff is None:
            tf_eff = 128  # TODO(synk): also tile d_model for extreme widths
    else:
        tf_eff = min(tf, d_ff_128)
    d_ff_p = _round_up(d_ff, tf_eff)

    grid_m = M_p // tm_eff
    grid_k = d_ff_p // tf_eff
    grid = (grid_m, grid_k)

    # ---- pad + cast inputs (zero padding is exact for this FFN) ----
    x2d = jnp.pad(x.reshape(M, d_model).astype(compute_dtype),
                  ((0, M_p - M), (0, d_model_p - d_model)))
    w1_p = jnp.pad(w1.astype(compute_dtype),
                   ((0, d_model_p - d_model), (0, d_ff_p - d_ff)))
    w2_p = jnp.pad(w2.astype(compute_dtype),
                   ((0, d_ff_p - d_ff), (0, d_model_p - d_model)))
    b1_p = jnp.pad(b1.astype(jnp.float32), (0, d_ff_p - d_ff)).reshape(1, d_ff_p)
    b2_p = jnp.pad(b2.astype(jnp.float32),
                   (0, d_model_p - d_model)).reshape(1, d_model_p)

    if grid_k == 1:
        kernel = _ffn_kernel_single
        scratch = []
        w_reads = 1                  # weights resident across row tiles
    else:
        kernel = _ffn_kernel_acc
        scratch = [pltpu.VMEM((tm_eff, d_model_p), jnp.float32)]
        w_reads = grid_m             # weight slices re-streamed per row tile

    cost = pl.CostEstimate(
        flops=4 * M_p * d_model_p * d_ff_p,           # two matmuls
        transcendentals=0,
        bytes_accessed=(M_p * d_model_p * comp_is
                        + w_reads * 2 * d_model_p * d_ff_p * comp_is
                        + (d_ff_p + d_model_p) * 4
                        + M_p * d_model_p * out_is),
    )

    out2d = pl.pallas_call(
        kernel,
        out_shape=jax.ShapeDtypeStruct((M_p, d_model_p), out_dtype),
        grid_spec=pltpu.PrefetchScalarGridSpec(
            num_scalar_prefetch=0,
            grid=grid,
            in_specs=[
                pl.BlockSpec((tm_eff, d_model_p), lambda i, k: (i, 0)),   # x rows
                pl.BlockSpec((d_model_p, tf_eff), lambda i, k: (0, k)),   # W1 slice
                pl.BlockSpec((1, tf_eff),         lambda i, k: (0, k)),   # b1 slice
                pl.BlockSpec((tf_eff, d_model_p), lambda i, k: (k, 0)),   # W2 slice
                pl.BlockSpec((1, d_model_p),      lambda i, k: (0, 0)),   # b2
            ],
            out_specs=pl.BlockSpec((tm_eff, d_model_p), lambda i, k: (i, 0)),
            scratch_shapes=scratch,
        ),
        compiler_params=pltpu.CompilerParams(
            dimension_semantics=("parallel", "arbitrary"),
            vmem_limit_bytes=64 * 1024 * 1024,
        ),
        cost_estimate=cost,
    )(x2d, w1_p, b1_p, w2_p, b2_p)

    return out2d[:M, :d_model].reshape(B, S, d_model)


def init_params(key, d_model, d_ff, dtype=jnp.float32):
    """Deterministic init mirroring nn.Linear: U(-1/sqrt(fan_in), 1/sqrt(fan_in)).
       Weights are stored transposed vs nn.Linear.weight so the kernel does x @ W."""
    k1, k2, k3, k4 = jax.random.split(key, 4)
    bound1 = 1.0 / (d_model ** 0.5)
    bound2 = 1.0 / (d_ff ** 0.5)
    w1 = jax.random.uniform(k1, (d_model, d_ff), dtype, -bound1, bound1)
    b1 = jax.random.uniform(k2, (d_ff,), dtype, -bound1, bound1)
    w2 = jax.random.uniform(k3, (d_ff, d_model), dtype, -bound2, bound2)
    b2 = jax.random.uniform(k4, (d_model,), dtype, -bound2, bound2)
    return w1, b1, w2, b2


def _ref_ffn(x, w1, b1, w2, b2):
    return jnp.maximum(x @ w1 + b1, 0.0) @ w2 + b2


if __name__ == "__main__":
    key = jax.random.PRNGKey(0)

    # --- case 1: lane-aligned dims, single-k (resident-weights) path ---
    B, S, d_model, d_ff = 2, 16, 128, 256
    kx, kp, key = jax.random.split(key, 3)
    x = jax.random.normal(kx, (B, S, d_model), jnp.float32)
    w1, b1, w2, b2 = init_params(kp, d_model, d_ff)

    out = position_wise_ffn(x, w1, b1, w2, b2)
    jax.block_until_ready(out)
    ref = _ref_ffn(x, w1, b1, w2, b2)
    assert out.shape == (B, S, d_model)
    assert jnp.allclose(out, ref, atol=3e-2, rtol=3e-2), (
        float(jnp.max(jnp.abs(out - ref))))

    # --- case 2: force d_ff tiling (accumulator path) + unaligned dims ---
    B2, S2, d_model2, d_ff2 = 2, 8, 120, 200
    kx2, kp2 = jax.random.split(key)
    x2 = jax.random.normal(kx2, (B2, S2, d_model2), jnp.float32)
    w1b, b1b, w2b, b2b = init_params(kp2, d_model2, d_ff2)

    out2 = position_wise_ffn(x2, w1b, b1b, w2b, b2b, tf=128)
    jax.block_until_ready(out2)
    ref2 = _ref_ffn(x2, w1b, b1b, w2b, b2b)
    assert out2.shape == (B2, S2, d_model2)
    assert jnp.allclose(out2, ref2, atol=3e-2, rtol=3e-2), (
        float(jnp.max(jnp.abs(out2 - ref2))))

    print("KERNEL_OK")
</pallas_src>

<mosaic_0001>
module attributes {stable_mosaic.version = 11 : i64} {
  func.func @_ffn_kernel_single(%arg0: i32, %arg1: i32, %arg2: memref<32x128xbf16, #tpu.memory_space<vmem>>, %arg3: memref<128x256xbf16, #tpu.memory_space<vmem>>, %arg4: memref<1x256xf32, #tpu.memory_space<vmem>>, %arg5: memref<256x128xbf16, #tpu.memory_space<vmem>>, %arg6: memref<1x128xf32, #tpu.memory_space<vmem>>, %arg7: memref<32x128xf32, #tpu.memory_space<vmem>>) attributes {dimension_semantics = [#tpu.dimension_semantics<parallel>, #tpu.dimension_semantics<arbitrary>], iteration_bounds = array<i64: 1, 1>, scalar_prefetch = 0 : i64, scratch_operands = 0 : i64, tpu.core_type = #tpu.core_type<tc>, window_params = [{transform_indices = @transform_0, window_bounds = array<i64: 32, 128>}, {transform_indices = @transform_1, window_bounds = array<i64: 128, 256>}, {transform_indices = @transform_2, window_bounds = array<i64: 1, 256>}, {transform_indices = @transform_3, window_bounds = array<i64: 256, 128>}, {pipeline_mode = #tpu.pipeline_mode<synchronous>, transform_indices = @transform_4, window_bounds = array<i64: 1, 128>}, {transform_indices = @transform_5, window_bounds = array<i64: 32, 128>}]} {
    %c0 = arith.constant 0 : index
    %c0_0 = arith.constant 0 : index
    %0 = vector.load %arg2[%c0, %c0_0] : memref<32x128xbf16, #tpu.memory_space<vmem>>, vector<32x128xbf16>
    %c0_1 = arith.constant 0 : index
    %c0_2 = arith.constant 0 : index
    %1 = vector.load %arg3[%c0_1, %c0_2] : memref<128x256xbf16, #tpu.memory_space<vmem>>, vector<128x256xbf16>
    %cst = arith.constant dense<0.000000e+00> : vector<32x256xf32>
    %2 = tpu.matmul %0, %1, %cst {dimension_numbers = #tpu.dot_dimension_numbers<[1], [0], [0], [1], [0, 0, 1, 1], [], []>} : vector<32x128xbf16>, vector<128x256xbf16>, vector<32x256xf32> -> vector<32x256xf32>
    %c0_3 = arith.constant 0 : index
    %c0_4 = arith.constant 0 : index
    %3 = vector.load %arg4[%c0_3, %c0_4] : memref<1x256xf32, #tpu.memory_space<vmem>>, vector<1x256xf32>
    %4 = vector.broadcast %3 : vector<1x256xf32> to vector<32x256xf32>
    %5 = arith.addf %2, %4 : vector<32x256xf32>
    %cst_5 = arith.constant 0.000000e+00 : f32
    %6 = vector.broadcast %cst_5 : f32 to vector<32x256xf32>
    %7 = arith.maximumf %5, %6 : vector<32x256xf32>
    %8 = arith.truncf %7 : vector<32x256xf32> to vector<32x256xbf16>
    %c0_6 = arith.constant 0 : index
    %c0_7 = arith.constant 0 : index
    %9 = vector.load %arg5[%c0_6, %c0_7] : memref<256x128xbf16, #tpu.memory_space<vmem>>, vector<256x128xbf16>
    %cst_8 = arith.constant dense<0.000000e+00> : vector<32x128xf32>
    %10 = tpu.matmul %8, %9, %cst_8 {dimension_numbers = #tpu.dot_dimension_numbers<[1], [0], [0], [1], [0, 0, 1, 1], [], []>} : vector<32x256xbf16>, vector<256x128xbf16>, vector<32x128xf32> -> vector<32x128xf32>
    %c0_9 = arith.constant 0 : index
    %c0_10 = arith.constant 0 : index
    %11 = vector.load %arg6[%c0_9, %c0_10] : memref<1x128xf32, #tpu.memory_space<vmem>>, vector<1x128xf32>
    %12 = vector.broadcast %11 : vector<1x128xf32> to vector<32x128xf32>
    %13 = arith.addf %10, %12 : vector<32x128xf32>
    %c0_11 = arith.constant 0 : index
    %c0_12 = arith.constant 0 : index
    %14 = vector.load %arg7[%c0_11, %c0_12] : memref<32x128xf32, #tpu.memory_space<vmem>>, vector<32x128xf32>
    tpu.vector_store %arg7[%c0_11, %c0_12], %13 {strides = array<i32>} : memref<32x128xf32, #tpu.memory_space<vmem>>, vector<32x128xf32>,
    return
  }
  func.func @transform_0(%arg0: i32, %arg1: i32) -> (i32, i32) {
    %c0_i32 = arith.constant 0 : i32
    %c0_i32_0 = arith.constant 0 : i32
    return %arg0, %c0_i32 : i32, i32
  }
  func.func @transform_1(%arg0: i32, %arg1: i32) -> (i32, i32) {
    %c0_i32 = arith.constant 0 : i32
    %c0_i32_0 = arith.constant 0 : i32
    return %c0_i32, %arg1 : i32, i32
  }
  func.func @transform_2(%arg0: i32, %arg1: i32) -> (i32, i32) {
    %c0_i32 = arith.constant 0 : i32
    %c0_i32_0 = arith.constant 0 : i32
    return %c0_i32, %arg1 : i32, i32
  }
  func.func @transform_3(%arg0: i32, %arg1: i32) -> (i32, i32) {
    %c0_i32 = arith.constant 0 : i32
    %c0_i32_0 = arith.constant 0 : i32
    return %arg1, %c0_i32 : i32, i32
  }
  func.func @transform_4(%arg0: i32, %arg1: i32) -> (i32, i32) {
    %c0_i32 = arith.constant 0 : i32
    %c0_i32_0 = arith.constant 0 : i32
    %c0_i32_1 = arith.constant 0 : i32
    return %c0_i32, %c0_i32_0 : i32, i32
  }
  func.func @transform_5(%arg0: i32, %arg1: i32) -> (i32, i32) {
    %c0_i32 = arith.constant 0 : i32
    %c0_i32_0 = arith.constant 0 : i32
    return %arg0, %c0_i32 : i32, i32
  }
}

</mosaic_0001>

<llo_original>
// kernel: position_wise_ffn.1
$region0: #{position_wise_ffn.1}
  #allocation0 [shape = 'u32[]', space=smem, size = 0x4, offset = 0x4, fixed_abs, tag = 'smem constant byte address 0x4 - core index']
  #allocation1 [shape = 'u32[144,128]{1,0:T(1,128)}', space=vmem, size = 0x12000, scoped, tag = 'internal scratch']
  %s0 = inlined_call_operand.hbm [shape: bf16[32,128], index: 0, kind: input, shape index: {}]
  %s1 = inlined_call_operand.hbm [shape: bf16[128,256], index: 1, kind: input, shape index: {}]
  %s2 = inlined_call_operand.hbm [shape: f32[1,256], index: 2, kind: input, shape index: {}]
  %s3 = inlined_call_operand.hbm [shape: bf16[256,128], index: 3, kind: input, shape index: {}]
  %s4 = inlined_call_operand.hbm [shape: f32[1,128], index: 4, kind: input, shape index: {}]
  %s5 = inlined_call_operand.hbm [shape: f32[32,128], index: 5, kind: output, shape index: {}]
  %s6 = sld [smem:[#allocation0]]
  $region50: #{position_wise_ffn.1} parent=0
    _
  %s8 = ssub.s32 1, %s6
  %s9 = scalar_select 0, %s8, %s6
  $region1: #{position_wise_ffn.1} parent=0
    #allocation2 [shape = 'u8[8192]{0}', space=vmem, size = 0x2000, scoped, tag = 'input window, operand 0, single buffered']
    #allocation3 [shape = 's32[1]{0}', space=sflag, size = 0x4, scoped, tag = 'scoped memory for position_wise_ffn.1']
    #allocation4 [shape = 's32[1]{0}', space=sflag, size = 0x4, scoped, tag = 'scoped memory for position_wise_ffn.1']
    #allocation5 [shape = 'u8[65536]{0}', space=vmem, size = 0x10000, scoped, tag = 'input window, operand 1, single buffered']
    #allocation6 [shape = 's32[1]{0}', space=sflag, size = 0x4, scoped, tag = 'scoped memory for position_wise_ffn.1']
    #allocation7 [shape = 'u8[1024]{0}', space=vmem, size = 0x400, scoped, tag = 'input window, operand 2, single buffered']
    #allocation8 [shape = 'u8[65536]{0}', space=vmem, size = 0x10000, scoped, tag = 'input window, operand 3, single buffered']
    #allocation9 [shape = 's32[1]{0}', space=sflag, size = 0x4, scoped, tag = 'scoped memory for position_wise_ffn.1']
    #allocation10 [shape = 'u8[512]{0}', space=vmem, size = 0x400, scoped, tag = 'input window, operand 4, single buffered']
    #allocation11 [shape = 'u8[16384]{0}', space=vmem, size = 0x4000, scoped, tag = 'output window, operand 0, single buffered']
    %10 = vsyncpa [#allocation3], 0
    %11 = vsyncpa [#allocation6], 0
    %12 = vsyncpa [#allocation9], 0
    %13 = vsyncpa [#allocation4], 0
    // Predicated region
    $region2: #{position_wise_ffn.1} parent=1 // pred_check
      _
    $region3: #{position_wise_ffn.1} parent=1 // pred_check_branch
      %15 = sbr.rel (0) target = $region5
    $region4: #{position_wise_ffn.1} parent=1 // pred_region
      %s17 = ssub.s32 256, 256
      %18 = vsyncadd [#allocation3], %s17
      %s19 = sshll.u32 [#allocation2], 4
      %s20 = int_to_ptr.vmem [resolvable:$true] %s19
      %25 = dma.hbm_to_vmem [thread:$0]  %s0, 256, %s20, [#allocation3], 64, 64, 4
    $region5: #{position_wise_ffn.1} parent=1 // pred_fallthru
      _
    // Predicated region
    $region6: #{position_wise_ffn.1} parent=1 // pred_check
      _
    $region7: #{position_wise_ffn.1} parent=1 // pred_check_branch
      %27 = sbr.rel (0) target = $region9
    $region8: #{position_wise_ffn.1} parent=1 // pred_region
      %s29 = ssub.s32 2048, 2048
      %30 = vsyncadd [#allocation6], %s29
      %s31 = sshll.u32 [#allocation5], 4
      %s32 = int_to_ptr.vmem [resolvable:$true] %s31
      %37 = dma.hbm_to_vmem [thread:$0]  %s1, 2048, %s32, [#allocation6], 128, 128, 8
    $region9: #{position_wise_ffn.1} parent=1 // pred_fallthru
      _
    // Predicated region
    $region10: #{position_wise_ffn.1} parent=1 // pred_check
      _
    $region11: #{position_wise_ffn.1} parent=1 // pred_check_branch
      %39 = sbr.rel (0) target = $region13
    $region12: #{position_wise_ffn.1} parent=1 // pred_region
      %s41 = ssub.s32 32, 32
      %42 = vsyncadd [#allocation6], %s41
      %s44 = sshll.u32 [#allocation7], 4
      %s45 = int_to_ptr.vmem [resolvable:$true] %s44
      %47 = dma.hbm_to_vmem [thread:$0]  %s2, 32, %s45, [#allocation6]
    $region13: #{position_wise_ffn.1} parent=1 // pred_fallthru
      _
    // Predicated region
    $region14: #{position_wise_ffn.1} parent=1 // pred_check
      _
    $region15: #{position_wise_ffn.1} parent=1 // pred_check_branch
      %49 = sbr.rel (0) target = $region17
    $region16: #{position_wise_ffn.1} parent=1 // pred_region
      %s51 = ssub.s32 2048, 2048
      %52 = vsyncadd [#allocation9], %s51
      %s53 = sshll.u32 [#allocation8], 4
      %s54 = int_to_ptr.vmem [resolvable:$true] %s53
      %59 = dma.hbm_to_vmem [thread:$0]  %s3, 2048, %s54, [#allocation9], 64, 64, 4
    $region17: #{position_wise_ffn.1} parent=1 // pred_fallthru
      _
    // Predicated region
    $region18: #{position_wise_ffn.1} parent=1 // pred_check
      _
    $region19: #{position_wise_ffn.1} parent=1 // pred_check_branch
      %61 = sbr.rel (0) target = $region21
    $region20: #{position_wise_ffn.1} parent=1 // pred_region
      %s63 = ssub.s32 16, 16
      %64 = vsyncadd [#allocation9], %s63
      %s66 = sshll.u32 [#allocation10], 4
      %s67 = int_to_ptr.vmem [resolvable:$true] %s66
      %69 = dma.hbm_to_vmem [thread:$0]  %s4, 16, %s67, [#allocation9]
    $region21: #{position_wise_ffn.1} parent=1 // pred_fallthru
      _
    // Predicated region
    $region22: #{position_wise_ffn.1} parent=1 // pred_check
      _
    $region23: #{position_wise_ffn.1} parent=1 // pred_check_branch
      %71 = sbr.rel (0) target = $region25
    $region24: #{position_wise_ffn.1} parent=1 // pred_region
      %72 = dma.done [#allocation3], 256
    $region25: #{position_wise_ffn.1} parent=1 // pred_fallthru
      _
    // Predicated region
    $region26: #{position_wise_ffn.1} parent=1 // pred_check
      _
    $region27: #{position_wise_ffn.1} parent=1 // pred_check_branch
      %74 = sbr.rel (0) target = $region29
    $region28: #{position_wise_ffn.1} parent=1 // pred_region
      %75 = dma.done [#allocation6], 2048
    $region29: #{position_wise_ffn.1} parent=1 // pred_fallthru
      _
    // Predicated region
    $region30: #{position_wise_ffn.1} parent=1 // pred_check
      _
    $region31: #{position_wise_ffn.1} parent=1 // pred_check_branch
      %77 = sbr.rel (0) target = $region33
    $region32: #{position_wise_ffn.1} parent=1 // pred_region
      %78 = dma.done [#allocation6], 32
    $region33: #{position_wise_ffn.1} parent=1 // pred_fallthru
      _
    // Predicated region
    $region34: #{position_wise_ffn.1} parent=1 // pred_check
      _
    $region35: #{position_wise_ffn.1} parent=1 // pred_check_branch
      %80 = sbr.rel (0) target = $region37
    $region36: #{position_wise_ffn.1} parent=1 // pred_region
      %81 = dma.done [#allocation9], 2048
    $region37: #{position_wise_ffn.1} parent=1 // pred_fallthru
      _
    // Predicated region
    $region38: #{position_wise_ffn.1} parent=1 // pred_check
      _
    $region39: #{position_wise_ffn.1} parent=1 // pred_check_branch
      %83 = sbr.rel (0) target = $region41
    $region40: #{position_wise_ffn.1} parent=1 // pred_region
      %84 = dma.done [#allocation9], 16
    $region41: #{position_wise_ffn.1} parent=1 // pred_fallthru
      _
    %v86 = vld [vmem:[#allocation2] sm:$0xf]
    %v87 = vld [vmem:[#allocation2 + $0x4] sm:$0xf]
    %v88 = vld [vmem:[#allocation2 + $0x8] sm:$0xf]
    %v89 = vld [vmem:[#allocation2 + $0xc] sm:$0xf]
    %v90 = vld [vmem:[#allocation5] sm:$0xff]
    %v91 = vld [vmem:[#allocation5 + $0x8] sm:$0xff]
    %v92 = vld [vmem:[#allocation5 + $0x10] sm:$0xff]
    %v93 = vld [vmem:[#allocation5 + $0x18] sm:$0xff]
    %v94 = vld [vmem:[#allocation5 + $0x20] sm:$0xff]
    %v95 = vld [vmem:[#allocation5 + $0x28] sm:$0xff]
    %v96 = vld [vmem:[#allocation5 + $0x30] sm:$0xff]
    %v97 = vld [vmem:[#allocation5 + $0x38] sm:$0xff]
    %v98 = vld [vmem:[#allocation5 + $0x40] sm:$0xff]
    %v99 = vld [vmem:[#allocation5 + $0x48] sm:$0xff]
    %v100 = vld [vmem:[#allocation5 + $0x50] sm:$0xff]
    %v101 = vld [vmem:[#allocation5 + $0x58] sm:$0xff]
    %v102 = vld [vmem:[#allocation5 + $0x60] sm:$0xff]
    %v103 = vld [vmem:[#allocation5 + $0x68] sm:$0xff]
    %v104 = vld [vmem:[#allocation5 + $0x70] sm:$0xff]
    %v105 = vld [vmem:[#allocation5 + $0x78] sm:$0xff]
    %v106 = vld [vmem:[#allocation7] sm:$0x3]
    %v108 = vlaneseq
    %v109 = vshrl.u32 %v108, 7
    %v110 = vsub.s32 0, %v109
    %v111 = vrot.slane %v106, %v110
    %v112 = vlaneseq
    %v113 = vshrl.u32 %v112, 7
    %v114 = vsub.s32 1, %v113
    %v115 = vrot.slane %v106, %v114
    %v122 = vunpack.c.l.b16 %v86
    %v123 = vunpack.c.l.b16 %v87
    %v124 = vunpack.c.l.b16 %v88
    %v125 = vunpack.c.l.b16 %v89
    %v126 = vpack.c.b16 %v123, %v122
    %v127 = vpack.c.b16 %v125, %v124
    %v146 = vunpack.c.l.b16 %v90
    %v147 = vunpack.c.h.b16 %v90
    %v148 = vunpack.c.l.b16 %v91
    %v149 = vunpack.c.h.b16 %v91
    %v150 = vunpack.c.l.b16 %v92
    %v151 = vunpack.c.h.b16 %v92
    %v152 = vunpack.c.l.b16 %v93
    %v153 = vunpack.c.h.b16 %v93
    %v154 = vunpack.c.l.b16 %v94
    %v155 = vunpack.c.h.b16 %v94
    %v156 = vunpack.c.l.b16 %v95
    %v157 = vunpack.c.h.b16 %v95
    %v158 = vunpack.c.l.b16 %v96
    %v159 = vunpack.c.h.b16 %v96
    %v160 = vunpack.c.l.b16 %v97
    %v161 = vunpack.c.h.b16 %v97
    %v162 = vunpack.c.l.b16 %v98
    %v163 = vunpack.c.h.b16 %v98
    %v164 = vunpack.c.l.b16 %v99
    %v165 = vunpack.c.h.b16 %v99
    %v166 = vunpack.c.l.b16 %v100
    %v167 = vunpack.c.h.b16 %v100
    %v168 = vunpack.c.l.b16 %v101
    %v169 = vunpack.c.h.b16 %v101
    %v170 = vunpack.c.l.b16 %v102
    %v171 = vunpack.c.h.b16 %v102
    %v172 = vunpack.c.l.b16 %v103
    %v173 = vunpack.c.h.b16 %v103
    %v174 = vunpack.c.l.b16 %v104
    %v175 = vunpack.c.h.b16 %v104
    %v176 = vunpack.c.l.b16 %v105
    %v177 = vunpack.c.h.b16 %v105
    %v178 = vpack.c.b16 %v148, %v146
    %v179 = vpack.c.b16 %v149, %v147
    %v180 = vpack.c.b16 %v152, %v150
    %v181 = vpack.c.b16 %v153, %v151
    %v182 = vpack.c.b16 %v156, %v154
    %v183 = vpack.c.b16 %v157, %v155
    %v184 = vpack.c.b16 %v160, %v158
    %v185 = vpack.c.b16 %v161, %v159
    %v186 = vpack.c.b16 %v164, %v162
    %v187 = vpack.c.b16 %v165, %v163
    %v188 = vpack.c.b16 %v168, %v166
    %v189 = vpack.c.b16 %v169, %v167
    %v190 = vpack.c.b16 %v172, %v170
    %v191 = vpack.c.b16 %v173, %v171
    %v192 = vpack.c.b16 %v176, %v174
    %v193 = vpack.c.b16 %v177, %v175
    %210 = vmatprep.subr.bf16.mxu0 %v179
    %211 = vmatpush1.bf16.msra.mxu0 %v178
    %212 = vmatprep.subr.bf16.mxu0 %v181
    %213 = vmatpush1.bf16.msra.mxu0 %v180
    %214 = vmatprep.subr.bf16.mxu0 %v183
    %215 = vmatpush1.bf16.msra.mxu0 %v182
    %216 = vmatprep.subr.bf16.mxu0 %v185
    %217 = vmatpush1.bf16.msra.mxu0 %v184
    %218 = vmatprep.subr.bf16.mxu0 %v187
    %219 = vmatpush1.bf16.msra.mxu0 %v186
    %220 = vmatprep.subr.bf16.mxu0 %v189
    %221 = vmatpush1.bf16.msra.mxu0 %v188
    %222 = vmatprep.subr.bf16.mxu0 %v191
    %223 = vmatpush1.bf16.msra.mxu0 %v190
    %224 = vmatprep.subr.bf16.mxu0 %v193
    %225 = vmatpush1.bf16.msra.mxu0 %v192
    %226 = vmatprep.subr.bf16.mxu0 0
    %227 = vmatpush1.bf16.msra.mxu0 0
    %228 = vmatprep.subr.bf16.mxu0 0
    %229 = vmatpush1.bf16.msra.mxu0 0
    %230 = vmatprep.subr.bf16.mxu0 0
    %231 = vmatpush1.bf16.msra.mxu0 0
    %232 = vmatprep.subr.bf16.mxu0 0
    %233 = vmatpush1.bf16.msra.mxu0 0
    %234 = vmatprep.subr.bf16.mxu0 0
    %235 = vmatpush1.bf16.msra.mxu0 0
    %236 = vmatprep.subr.bf16.mxu0 0
    %237 = vmatpush1.bf16.msra.mxu0 0
    %238 = vmatprep.subr.bf16.mxu0 0
    %239 = vmatpush1.bf16.msra.mxu0 0
    %240 = vmatprep.subr.bf16.mxu0 0
    %241 = vmatpush1.bf16.msra.mxu0 0
    %242 = vmatprep.mubr.bf16.mxu0 0
    %243 = vmatmul.mubr.bf16.gmra.mrb[0].mxu0 %v126
    %v244 = vpop.f32.mrb[0].mxu0
    %v245 = vadd.f32 %v111, %v244
    %v246 = vpop.f32.mrb[0].mxu0
    %v247 = vadd.f32 %v115, %v246
    %v248 = vpop.f32.mrb[0].mxu0
    %v249 = vadd.f32 %v111, %v248
    %v250 = vpop.f32.mrb[0].mxu0
    %v251 = vadd.f32 %v115, %v250
    %252 = vmatprep.mubr.bf16.mxu0 0
    %253 = vmatmul.mubr.bf16.gmra.mrb[0].mxu0 %v127
    %v254 = vpop.f32.mrb[0].mxu0
    %v255 = vadd.f32 %v111, %v254
    %v256 = vpop.f32.mrb[0].mxu0
    %v257 = vadd.f32 %v115, %v256
    %v258 = vpop.f32.mrb[0].mxu0
    %v259 = vadd.f32 %v111, %v258
    %v260 = vpop.f32.mrb[0].mxu0
    %v261 = vadd.f32 %v115, %v260
    %262 = vdwg.mxu0
    %v263 = vmax.f32 %v245, 0.0
    %v264 = vmax.f32 %v247, 0.0
    %v265 = vmax.f32 %v249, 0.0
    %v266 = vmax.f32 %v251, 0.0
    %v267 = vmax.f32 %v255, 0.0
    %v268 = vmax.f32 %v257, 0.0
    %v269 = vmax.f32 %v259, 0.0
    %v270 = vmax.f32 %v261, 0.0
    %v271 = vpack.c.bf16 %v265, %v263
    %v272 = vpack.c.bf16 %v266, %v264
    %v273 = vpack.c.bf16 %v269, %v267
    %v274 = vpack.c.bf16 %v270, %v268
    %v275 = vld [vmem:[#allocation8] sm:$0xf]
    %v276 = vld [vmem:[#allocation8 + $0x4] sm:$0xf]
    %v277 = vld [vmem:[#allocation8 + $0x8] sm:$0xf]
    %v278 = vld [vmem:[#allocation8 + $0xc] sm:$0xf]
    %v279 = vld [vmem:[#allocation8 + $0x10] sm:$0xf]
    %v280 = vld [vmem:[#allocation8 + $0x14] sm:$0xf]
    %v281 = vld [vmem:[#allocation8 + $0x18] sm:$0xf]
    %v282 = vld [vmem:[#allocation8 + $0x1c] sm:$0xf]
    %v283 = vld [vmem:[#allocation8 + $0x20] sm:$0xf]
    %v284 = vld [vmem:[#allocation8 + $0x24] sm:$0xf]
    %v285 = vld [vmem:[#allocation8 + $0x28] sm:$0xf]
    %v286 = vld [vmem:[#allocation8 + $0x2c] sm:$0xf]
    %v287 = vld [vmem:[#allocation8 + $0x30] sm:$0xf]
    %v288 = vld [vmem:[#allocation8 + $0x34] sm:$0xf]
    %v289 = vld [vmem:[#allocation8 + $0x38] sm:$0xf]
    %v290 = vld [vmem:[#allocation8 + $0x3c] sm:$0xf]
    %v291 = vld [vmem:[#allocation8 + $0x40] sm:$0xf]
    %v292 = vld [vmem:[#allocation8 + $0x44] sm:$0xf]
    %v293 = vld [vmem:[#allocation8 + $0x48] sm:$0xf]
    %v294 = vld [vmem:[#allocation8 + $0x4c] sm:$0xf]
    %v295 = vld [vmem:[#allocation8 + $0x50] sm:$0xf]
    %v296 = vld [vmem:[#allocation8 + $0x54] sm:$0xf]
    %v297 = vld [vmem:[#allocation8 + $0x58] sm:$0xf]
    %v298 = vld [vmem:[#allocation8 + $0x5c] sm:$0xf]
    %v299 = vld [vmem:[#allocation8 + $0x60] sm:$0xf]
    %v300 = vld [vmem:[#allocation8 + $0x64] sm:$0xf]
    %v301 = vld [vmem:[#allocation8 + $0x68] sm:$0xf]
    %v302 = vld [vmem:[#allocation8 + $0x6c] sm:$0xf]
    %v303 = vld [vmem:[#allocation8 + $0x70] sm:$0xf]
    %v304 = vld [vmem:[#allocation8 + $0x74] sm:$0xf]
    %v305 = vld [vmem:[#allocation8 + $0x78] sm:$0xf]
    %v306 = vld [vmem:[#allocation8 + $0x7c] sm:$0xf]
    %v307 = vld [vmem:[#allocation10] sm:$0x1]
    %v309 = vlaneseq
    %v310 = vshrl.u32 %v309, 7
    %v311 = vsub.s32 0, %v310
    %v312 = vrot.slane %v307, %v311
    %v346 = vunpack.c.l.b16 %v275
    %v347 = vunpack.c.l.b16 %v276
    %v348 = vunpack.c.l.b16 %v277
    %v349 = vunpack.c.l.b16 %v278
    %v350 = vunpack.c.l.b16 %v279
    %v351 = vunpack.c.l.b16 %v280
    %v352 = vunpack.c.l.b16 %v281
    %v353 = vunpack.c.l.b16 %v282
    %v354 = vunpack.c.l.b16 %v283
    %v355 = vunpack.c.l.b16 %v284
    %v356 = vunpack.c.l.b16 %v285
    %v357 = vunpack.c.l.b16 %v286
    %v358 = vunpack.c.l.b16 %v287
    %v359 = vunpack.c.l.b16 %v288
    %v360 = vunpack.c.l.b16 %v289
    %v361 = vunpack.c.l.b16 %v290
    %v362 = vunpack.c.l.b16 %v291
    %v363 = vunpack.c.l.b16 %v292
    %v364 = vunpack.c.l.b16 %v293
    %v365 = vunpack.c.l.b16 %v294
    %v366 = vunpack.c.l.b16 %v295
    %v367 = vunpack.c.l.b16 %v296
    %v368 = vunpack.c.l.b16 %v297
    %v369 = vunpack.c.l.b16 %v298
    %v370 = vunpack.c.l.b16 %v299
    %v371 = vunpack.c.l.b16 %v300
    %v372 = vunpack.c.l.b16 %v301
    %v373 = vunpack.c.l.b16 %v302
    %v374 = vunpack.c.l.b16 %v303
    %v375 = vunpack.c.l.b16 %v304
    %v376 = vunpack.c.l.b16 %v305
    %v377 = vunpack.c.l.b16 %v306
    %v378 = vpack.c.b16 %v347, %v346
    %v379 = vpack.c.b16 %v349, %v348
    %v380 = vpack.c.b16 %v351, %v350
    %v381 = vpack.c.b16 %v353, %v352
    %v382 = vpack.c.b16 %v355, %v354
    %v383 = vpack.c.b16 %v357, %v356
    %v384 = vpack.c.b16 %v359, %v358
    %v385 = vpack.c.b16 %v361, %v360
    %v386 = vpack.c.b16 %v363, %v362
    %v387 = vpack.c.b16 %v365, %v364
    %v388 = vpack.c.b16 %v367, %v366
    %v389 = vpack.c.b16 %v369, %v368
    %v390 = vpack.c.b16 %v371, %v370
    %v391 = vpack.c.b16 %v373, %v372
    %v392 = vpack.c.b16 %v375, %v374
    %v393 = vpack.c.b16 %v377, %v376
    %410 = vmatprep.subr.bf16.mxu0 0
    %411 = vmatpush1.bf16.msra.mxu0 %v378
    %412 = vmatprep.subr.bf16.mxu0 0
    %413 = vmatpush1.bf16.msra.mxu0 %v379
    %414 = vmatprep.subr.bf16.mxu0 0
    %415 = vmatpush1.bf16.msra.mxu0 %v380
    %416 = vmatprep.subr.bf16.mxu0 0
    %417 = vmatpush1.bf16.msra.mxu0 %v381
    %418 = vmatprep.subr.bf16.mxu0 0
    %419 = vmatpush1.bf16.msra.mxu0 %v382
    %420 = vmatprep.subr.bf16.mxu0 0
    %421 = vmatpush1.bf16.msra.mxu0 %v383
    %422 = vmatprep.subr.bf16.mxu0 0
    %423 = vmatpush1.bf16.msra.mxu0 %v384
    %424 = vmatprep.subr.bf16.mxu0 0
    %425 = vmatpush1.bf16.msra.mxu0 %v385
    %426 = vmatprep.subr.bf16.mxu0 0
    %427 = vmatpush1.bf16.msra.mxu0 %v386
    %428 = vmatprep.subr.bf16.mxu0 0
    %429 = vmatpush1.bf16.msra.mxu0 %v387
    %430 = vmatprep.subr.bf16.mxu0 0
    %431 = vmatpush1.bf16.msra.mxu0 %v388
    %432 = vmatprep.subr.bf16.mxu0 0
    %433 = vmatpush1.bf16.msra.mxu0 %v389
    %434 = vmatprep.subr.bf16.mxu0 0
    %435 = vmatpush1.bf16.msra.mxu0 %v390
    %436 = vmatprep.subr.bf16.mxu0 0
    %437 = vmatpush1.bf16.msra.mxu0 %v391
    %438 = vmatprep.subr.bf16.mxu0 0
    %439 = vmatpush1.bf16.msra.mxu0 %v392
    %440 = vmatprep.subr.bf16.mxu0 0
    %441 = vmatpush1.bf16.msra.mxu0 %v393
    %442 = vmatprep.mubr.bf16.mxu0 %v272
    %443 = vmatmul.mubr.bf16.gmra.mrb[0].mxu0 %v271
    %v444 = vpop.f32.mrb[0].mxu0
    %v445 = vadd.f32 %v312, %v444
    %v446 = vpop.f32.mrb[0].mxu0
    %v447 = vpop.f32.mrb[0].mxu0
    %v448 = vadd.f32 %v312, %v447
    %v449 = vpop.f32.mrb[0].mxu0
    %450 = vmatprep.mubr.bf16.mxu0 %v274
    %451 = vmatmul.mubr.bf16.gmra.mrb[0].mxu0 %v273
    %v452 = vpop.f32.mrb[0].mxu0
    %v453 = vadd.f32 %v312, %v452
    %v454 = vpop.f32.mrb[0].mxu0
    %v455 = vpop.f32.mrb[0].mxu0
    %v456 = vadd.f32 %v312, %v455
    %v457 = vpop.f32.mrb[0].mxu0
    %458 = vdwg.mxu0
    %459 = vst [vmem:[#allocation11] sm:$0xff] %v445
    %460 = vst [vmem:[#allocation11 + $0x8] sm:$0xff] %v448
    %461 = vst [vmem:[#allocation11 + $0x10] sm:$0xff] %v453
    %462 = vst [vmem:[#allocation11 + $0x18] sm:$0xff] %v456
    // Predicated region
    $region42: #{position_wise_ffn.1} parent=1 // pred_check
      _
    $region43: #{position_wise_ffn.1} parent=1 // pred_check_branch
      %464 = sbr.rel (0) target = $region45
    $region44: #{position_wise_ffn.1} parent=1 // pred_region
      %s466 = ssub.s32 512, 512
      %467 = vsyncadd [#allocation4], %s466
      %s468 = sshll.u32 [#allocation11], 4
      %s469 = int_to_ptr.vmem [resolvable:$true] %s468
      %474 = dma.vmem_to_hbm [thread:$0]  %s469, 512, %s5, [#allocation4], 128, 128, 8
    $region45: #{position_wise_ffn.1} parent=1 // pred_fallthru
      _
    // Predicated region
    $region46: #{position_wise_ffn.1} parent=1 // pred_check
      _
    $region47: #{position_wise_ffn.1} parent=1 // pred_check_branch
      %476 = sbr.rel (0) target = $region49
    $region48: #{position_wise_ffn.1} parent=1 // pred_region
      %477 = dma.done [#allocation4], 512
    $region49: #{position_wise_ffn.1} parent=1 // pred_fallthru
      _
    %478 = vsyncpa [#allocation3], 1
    %479 = vsyncpa [#allocation6], 1
    %480 = vsyncpa [#allocation9], 1
    %481 = vsyncpa [#allocation4], 1

</llo_original>
